<compile_context>
chip_gen: v6e
topology: v6e:2x2x1
jax: 0.10.0
libtpu: 0.0.40
codegen_flags: <defaults>
</compile_context>

<pallas_src>
import jax
import jax.numpy as jnp
from jax.experimental import pallas as pl
from jax.experimental.pallas import tpu as pltpu


def _round_up(n, m):
    return ((n + m - 1) // m) * m


def _pick_tm(batch, tm_max):
    """Largest multiple of 8 <= tm_max that minimizes batch padding."""
    b8 = _round_up(max(int(batch), 1), 8)
    tm_max = max(8, (int(tm_max) // 8) * 8)
    best_tm, best_pad = 8, _round_up(b8, 8)
    for cand in range(8, min(tm_max, b8) + 1, 8):
        pad = _round_up(b8, cand)
        if pad <= best_pad:            # prefer the largest tile on ties
            best_tm, best_pad = cand, pad
    return best_tm


# ----------------------------- training-mode kernel -----------------------------
def _concrete_train_kernel(inv_t_ref, x_ref, logit_ref, u_ref, o_ref, y_scratch):
    i = pl.program_id(1)               # batch tile (innermost, "arbitrary")

    @pl.when(i == 0)
    def _():
        # TODO(synk): overlap this per-output-tile softmax with the batch sweep of
        # the previous tile (double-buffered y_scratch + manual DMA), and K-tile it
        # (two-pass softmax) for very large input_dim on v7x's 64 MiB VMEM.
        u = u_ref[...]
        gumbel = -jnp.log(-jnp.log(u + 1e-10) + 1e-10)
        scaled = (logit_ref[...] + gumbel) * inv_t_ref[0]      # multiply by 1/T
        m = jnp.max(scaled, axis=0, keepdims=True)
        e = jnp.exp(scaled - m)
        denom = jnp.sum(e, axis=0, keepdims=True)
        y_scratch[...] = (e / denom).astype(jnp.bfloat16)      # bf16 MXU operand

    # y_scratch is reused across all batch tiles of this output tile.
    # bf16 x bf16 -> f32 accumulation on the MXU.
    o_ref[...] = jnp.dot(x_ref[...], y_scratch[...],
                         preferred_element_type=jnp.float32)


# ------------------------------- eval-mode kernel --------------------------------
def _concrete_eval_kernel(x_ref, logit_ref, o_ref, y_scratch):
    i = pl.program_id(1)               # batch tile (innermost)

    @pl.when(i == 0)
    def _():
        logits = logit_ref[...]
        m = jnp.max(logits, axis=0, keepdims=True)
        rows = jax.lax.broadcasted_iota(jnp.int32, logits.shape, 0)
        cand = jnp.where(logits == m, rows, jnp.int32(logits.shape[0]))
        idx = jnp.min(cand, axis=0, keepdims=True)    # first-occurrence argmax
        # TODO(synk): for very large input_dim, replace the dense one-hot matmul
        # with a scalar-prefetched argmax-index column gather of x.
        y_scratch[...] = (rows == idx).astype(jnp.bfloat16)    # exact 0/1 in bf16

    o_ref[...] = jnp.dot(x_ref[...], y_scratch[...],
                         preferred_element_type=jnp.float32)


# ------------------------------------ wrapper ------------------------------------
def concrete_layer_forward(x, logit_scale, temperature, *, key=None, training=True,
                           tm=256, tn=512):
    batch, input_dim = x.shape
    k2, output_dim = logit_scale.shape
    assert input_dim == k2

    K = _round_up(input_dim, 128)                 # full-K per block, lane aligned
    N0 = _round_up(output_dim, 128)               # lane-dense output
    TN = min(max(128, (int(tn) // 128) * 128), N0)
    N = _round_up(N0, TN)
    TM = _pick_tm(batch, tm)
    B = _round_up(_round_up(batch, 8), TM)

    # x is padded and shipped as bf16 (it is re-streamed N/TN times).  Logits are
    # padded with a large negative so padded K rows carry ~0 softmax mass / never
    # win the argmax (padded N columns are sliced off at the end).
    x_p = jnp.zeros((B, K), jnp.bfloat16).at[:batch, :input_dim].set(
        x.astype(jnp.bfloat16))
    logit_p = jnp.full((K, N), -1e9, jnp.float32).at[:input_dim, :output_dim].set(
        logit_scale.astype(jnp.float32))

    grid = (N // TN, B // TM)                     # j = output tile, i = batch tile
    x_spec = pl.BlockSpec((TM, K), lambda j, i: (i, 0))
    w_spec = pl.BlockSpec((K, TN), lambda j, i: (0, j))
    o_spec = pl.BlockSpec((TM, TN), lambda j, i: (i, j))

    def _vmem_bytes(train):
        x_blk = TM * K * 2                        # bf16
        w_blk = K * TN * 4
        o_blk = TM * TN * 4
        u_blk = K * TN * 4 if train else 0
        y_scr = K * TN * 2
        tmps = (2 if train else 1) * K * TN * 4   # softmax / one-hot temporaries
        total = 2 * (x_blk + w_blk + o_blk + u_blk) + y_scr + tmps
        total = int(total * 1.25) + (4 << 20)     # headroom
        return max(16 << 20, min(total, 64 << 20))   # clamp: safe on v7x (64 MiB)

    scratch_shapes = [pltpu.VMEM((K, TN), jnp.bfloat16)]   # shared y tile

    if training:
        if key is None:
            key = jax.random.PRNGKey(0)
        # Host-side uniform noise (mirrors torch.rand_like); padded rows get 0.5
        # (any valid uniform value -- their logits are -1e9 so they carry no mass).
        u = jax.random.uniform(key, (input_dim, output_dim), dtype=jnp.float32)
        u_p = jnp.full((K, N), 0.5, jnp.float32).at[:input_dim, :output_dim].set(u)
        inv_t = jnp.asarray([1.0 / float(temperature)], dtype=jnp.float32)

        cost = pl.CostEstimate(
            flops=2 * B * K * N,
            transcendentals=3 * K * N,
            bytes_accessed=(N // TN) * B * K * 2 + 2 * K * N * 4 + B * N * 4,
        )
        out_p = pl.pallas_call(
            _concrete_train_kernel,
            grid=grid,
            in_specs=[
                pl.BlockSpec(memory_space=pltpu.MemorySpace.SMEM),   # 1/temperature
                x_spec,
                w_spec,
                pl.BlockSpec((K, TN), lambda j, i: (0, j)),          # uniform noise
            ],
            out_specs=o_spec,
            out_shape=jax.ShapeDtypeStruct((B, N), jnp.float32),
            scratch_shapes=scratch_shapes,
            compiler_params=pltpu.CompilerParams(
                dimension_semantics=("parallel", "arbitrary"),
                vmem_limit_bytes=_vmem_bytes(True)),
            cost_estimate=cost,
        )(inv_t, x_p, logit_p, u_p)
        return out_p[:batch, :output_dim], u
    else:
        cost = pl.CostEstimate(
            flops=2 * B * K * N,
            transcendentals=0,
            bytes_accessed=(N // TN) * B * K * 2 + K * N * 4 + B * N * 4,
        )
        out_p = pl.pallas_call(
            _concrete_eval_kernel,
            grid=grid,
            in_specs=[x_spec, w_spec],
            out_specs=o_spec,
            out_shape=jax.ShapeDtypeStruct((B, N), jnp.float32),
            scratch_shapes=scratch_shapes,
            compiler_params=pltpu.CompilerParams(
                dimension_semantics=("parallel", "arbitrary"),
                vmem_limit_bytes=_vmem_bytes(False)),
            cost_estimate=cost,
        )(x_p, logit_p)
        return out_p[:batch, :output_dim], None


# ------------------------------------- test --------------------------------------
if __name__ == "__main__":
    key = jax.random.PRNGKey(0)
    k_x, k_w, k_u = jax.random.split(key, 3)

    # Small shapes that still exercise a (2, 2) grid: tn=128 -> 2 output tiles,
    # tm=8 with batch=16 -> 2 batch tiles.
    batch, input_dim, output_dim = 16, 32, 200
    temperature = 1.0

    x = jax.random.normal(k_x, (batch, input_dim), dtype=jnp.float32)
    logit_scale = jax.random.normal(k_w, (input_dim, output_dim), dtype=jnp.float32)

    # ---- training path ----
    out_train, u = concrete_layer_forward(
        x, logit_scale, temperature, key=k_u, training=True, tm=8, tn=128)
    out_train = jax.block_until_ready(out_train)

    # Reference built from the exact noise the kernel consumed (bf16 operands like
    # the kernel's MXU path, f32 accumulation).
    gumbel = -jnp.log(-jnp.log(u + 1e-10) + 1e-10)
    y_ref = jax.nn.softmax((logit_scale + gumbel) / temperature, axis=0)
    ref_train = jnp.dot(x.astype(jnp.bfloat16), y_ref.astype(jnp.bfloat16),
                        preferred_element_type=jnp.float32)
    assert bool(jnp.allclose(out_train, ref_train, atol=3e-2, rtol=3e-2)), \
        "train-mode mismatch"

    # ---- eval path ----
    out_eval, _ = concrete_layer_forward(
        x, logit_scale, temperature, training=False, tm=8, tn=128)
    out_eval = jax.block_until_ready(out_eval)

    idx = jnp.argmax(logit_scale, axis=0)
    ref_eval = x.astype(jnp.bfloat16).astype(jnp.float32)[:, idx]
    assert bool(jnp.allclose(out_eval, ref_eval, atol=1e-6, rtol=1e-6)), \
        "eval-mode mismatch"

    print("KERNEL_OK")
</pallas_src>

<mosaic_0001>
module attributes {stable_mosaic.version = 11 : i64} {
  func.func @_concrete_train_kernel(%arg0: i32, %arg1: i32, %arg2: memref<1xf32, #tpu.memory_space<smem>>, %arg3: memref<8x128xbf16, #tpu.memory_space<vmem>>, %arg4: memref<128x128xf32, #tpu.memory_space<vmem>>, %arg5: memref<128x128xf32, #tpu.memory_space<vmem>>, %arg6: memref<8x128xf32, #tpu.memory_space<vmem>>, %arg7: memref<128x128xbf16, #tpu.memory_space<vmem>>) attributes {dimension_semantics = [#tpu.dimension_semantics<parallel>, #tpu.dimension_semantics<arbitrary>], iteration_bounds = array<i64: 2, 2>, scalar_prefetch = 0 : i64, scratch_operands = 1 : i64, tpu.core_type = #tpu.core_type<tc>, window_params = [{transform_indices = @transform_0, window_bounds = array<i64: 1>}, {transform_indices = @transform_1, window_bounds = array<i64: 8, 128>}, {transform_indices = @transform_2, window_bounds = array<i64: 128, 128>}, {transform_indices = @transform_3, window_bounds = array<i64: 128, 128>}, {transform_indices = @transform_4, window_bounds = array<i64: 8, 128>}]} {
    %c0_i32 = arith.constant 0 : i32
    %0 = arith.cmpi eq, %arg1, %c0_i32 : i32
    %1 = arith.extui %0 : i1 to i32
    %c0_i32_0 = arith.constant 0 : i32
    %2 = arith.cmpi ne, %1, %c0_i32_0 : i32
    scf.if %2 {
      %c0_6 = arith.constant 0 : index
      %c0_7 = arith.constant 0 : index
      %7 = vector.load %arg5[%c0_6, %c0_7] : memref<128x128xf32, #tpu.memory_space<vmem>>, vector<128x128xf32>
      %cst_8 = arith.constant 1.000000e-10 : f32
      %8 = vector.broadcast %cst_8 : f32 to vector<128x128xf32>
      %9 = arith.addf %7, %8 : vector<128x128xf32>
      %10 = math.log %9 : vector<128x128xf32>
      %cst_9 = arith.constant 0.000000e+00 : f32
      %11 = vector.broadcast %cst_9 : f32 to vector<128x128xf32>
      %12 = arith.subf %11, %10 : vector<128x128xf32>
      %cst_10 = arith.constant 1.000000e-10 : f32
      %13 = vector.broadcast %cst_10 : f32 to vector<128x128xf32>
      %14 = arith.addf %12, %13 : vector<128x128xf32>
      %15 = math.log %14 : vector<128x128xf32>
      %cst_11 = arith.constant 0.000000e+00 : f32
      %16 = vector.broadcast %cst_11 : f32 to vector<128x128xf32>
      %17 = arith.subf %16, %15 : vector<128x128xf32>
      %c0_12 = arith.constant 0 : index
      %c0_13 = arith.constant 0 : index
      %18 = vector.load %arg4[%c0_12, %c0_13] : memref<128x128xf32, #tpu.memory_space<vmem>>, vector<128x128xf32>
      %19 = arith.addf %18, %17 : vector<128x128xf32>
      %c0_14 = arith.constant 0 : index
      %20 = memref.load %arg2[%c0_14] : memref<1xf32, #tpu.memory_space<smem>>
      %21 = vector.broadcast %20 : f32 to vector<128x128xf32>
      %22 = arith.mulf %19, %21 : vector<128x128xf32>
      %cst_15 = arith.constant dense<0xFF800000> : vector<128xf32>
      %23 = vector.multi_reduction <maximumf>, %22, %cst_15 [0] : vector<128x128xf32> to vector<128xf32>
      %24 = vector.shape_cast %23 : vector<128xf32> to vector<1x128xf32>
      %25 = vector.broadcast %24 : vector<1x128xf32> to vector<128x128xf32>
      %26 = arith.subf %22, %25 : vector<128x128xf32>
      %27 = math.exp %26 : vector<128x128xf32>
      %cst_16 = arith.constant dense<0.000000e+00> : vector<128xf32>
      %28 = vector.multi_reduction <add>, %27, %cst_16 [0] : vector<128x128xf32> to vector<128xf32>
      %29 = vector.shape_cast %28 : vector<128xf32> to vector<1x128xf32>
      %30 = vector.broadcast %29 : vector<1x128xf32> to vector<128x128xf32>
      %31 = arith.divf %27, %30 : vector<128x128xf32>
      %32 = arith.truncf %31 : vector<128x128xf32> to vector<128x128xbf16>
      %c0_17 = arith.constant 0 : index
      %c0_18 = arith.constant 0 : index
      %33 = vector.load %arg7[%c0_17, %c0_18] : memref<128x128xbf16, #tpu.memory_space<vmem>>, vector<128x128xbf16>
      tpu.vector_store %arg7[%c0_17, %c0_18], %32 {strides = array<i32>} : memref<128x128xbf16, #tpu.memory_space<vmem>>, vector<128x128xbf16>,
    } else {
    }
    %c0 = arith.constant 0 : index
    %c0_1 = arith.constant 0 : index
    %3 = vector.load %arg3[%c0, %c0_1] : memref<8x128xbf16, #tpu.memory_space<vmem>>, vector<8x128xbf16>
    %c0_2 = arith.constant 0 : index
    %c0_3 = arith.constant 0 : index
    %4 = vector.load %arg7[%c0_2, %c0_3] : memref<128x128xbf16, #tpu.memory_space<vmem>>, vector<128x128xbf16>
    %cst = arith.constant dense<0.000000e+00> : vector<8x128xf32>
    %5 = tpu.matmul %3, %4, %cst {dimension_numbers = #tpu.dot_dimension_numbers<[1], [0], [0], [1], [0, 0, 1, 1], [], []>} : vector<8x128xbf16>, vector<128x128xbf16>, vector<8x128xf32> -> vector<8x128xf32>
    %c0_4 = arith.constant 0 : index
    %c0_5 = arith.constant 0 : index
    %6 = vector.load %arg6[%c0_4, %c0_5] : memref<8x128xf32, #tpu.memory_space<vmem>>, vector<8x128xf32>
    tpu.vector_store %arg6[%c0_4, %c0_5], %5 {strides = array<i32>} : memref<8x128xf32, #tpu.memory_space<vmem>>, vector<8x128xf32>,
    return
  }
  func.func @transform_0(%arg0: i32, %arg1: i32) -> i32 {
    %c0_i32 = arith.constant 0 : i32
    %c0_i32_0 = arith.constant 0 : i32
    return %c0_i32 : i32
  }
  func.func @transform_1(%arg0: i32, %arg1: i32) -> (i32, i32) {
    %c0_i32 = arith.constant 0 : i32
    %c0_i32_0 = arith.constant 0 : i32
    return %arg1, %c0_i32 : i32, i32
  }
  func.func @transform_2(%arg0: i32, %arg1: i32) -> (i32, i32) {
    %c0_i32 = arith.constant 0 : i32
    %c0_i32_0 = arith.constant 0 : i32
    return %c0_i32, %arg0 : i32, i32
  }
  func.func @transform_3(%arg0: i32, %arg1: i32) -> (i32, i32) {
    %c0_i32 = arith.constant 0 : i32
    %c0_i32_0 = arith.constant 0 : i32
    return %c0_i32, %arg0 : i32, i32
  }
  func.func @transform_4(%arg0: i32, %arg1: i32) -> (i32, i32) {
    %c0_i32 = arith.constant 0 : i32
    return %arg1, %arg0 : i32, i32
  }
}

</mosaic_0001>

<llo_original>
// kernel: tpu_custom_call.1
$region0: #{tpu_custom_call.1}
  #allocation0 [shape = 'u32[]', space=smem, size = 0x4, offset = 0x4, fixed_abs, tag = 'smem constant byte address 0x4 - core index']
  #allocation1 [shape = 'u32[144,128]{1,0:T(1,128)}', space=vmem, size = 0x12000, scoped, tag = 'internal scratch']
  #allocation2 [shape = 'bf16[128,128]{1,0:T(8,128)(2,1)}', space=vmem, size = 0x8000, scoped, tag = 'scratch operand']
  #allocation3 [shape = 'f32[1]{0:T(128)S(6)}', space=smem, size = 0x200, scoped, tag = 'scoped memory for tpu_custom_call.1']
  %s0 = inlined_call_operand.<no memory space> [shape: f32[1], index: 0, kind: input, shape index: {}]
  %s1 = inlined_call_operand.hbm [shape: bf16[16,128], index: 1, kind: input, shape index: {}]
  %s2 = inlined_call_operand.hbm [shape: f32[128,256], index: 2, kind: input, shape index: {}]
  %s3 = inlined_call_operand.hbm [shape: f32[128,256], index: 3, kind: input, shape index: {}]
  %s4 = inlined_call_operand.hbm [shape: f32[16,256], index: 4, kind: output, shape index: {}]
  %s5 = sld [smem:[#allocation0]]
  $region65: #{tpu_custom_call.1} parent=0
    _
  %s7 = ssub.s32 1, %s5
  %s8 = scalar_select 0, %s7, %s5
  %9 = sst [smem:[#allocation3]] %s0
  $region1: #{tpu_custom_call.1} parent=0
    #allocation4 [shape = 'u8[4096]{0}', space=vmem, size = 0x1000, scoped, tag = 'input window, operand 1']
    #allocation5 [shape = 's32[2]{0}', space=sflag, size = 0x8, scoped, tag = 'scoped memory for tpu_custom_call.1']
    #allocation6 [shape = 's32[2]{0}', space=sflag, size = 0x8, scoped, tag = 'scoped memory for tpu_custom_call.1']
    #allocation7 [shape = 'u8[131072]{0}', space=vmem, size = 0x20000, scoped, tag = 'input window, operand 2']
    #allocation8 [shape = 's32[2]{0}', space=sflag, size = 0x8, scoped, tag = 'scoped memory for tpu_custom_call.1']
    #allocation9 [shape = 'u8[131072]{0}', space=vmem, size = 0x20000, scoped, tag = 'input window, operand 3']
    #allocation10 [shape = 'u8[8192]{0}', space=vmem, size = 0x2000, scoped, tag = 'output window, operand 0']
    %10 = vsyncpa [#allocation5], 0
    %s11 = scalar_lea.sflag [#allocation5], 1
    %12 = vsyncpa %s11, 0
    %13 = vsyncpa [#allocation8], 0
    %s14 = scalar_lea.sflag [#allocation8], 1
    %15 = vsyncpa %s14, 0
    %16 = vsyncpa [#allocation6], 0
    %s17 = scalar_lea.sflag [#allocation6], 1
    %18 = vsyncpa %s17, 0
    loop: start=0, step=1, limit=6
    $region2: #{tpu_custom_call.1} parent=1 // loop_pre_header
      _
    $region3: #{tpu_custom_call.1} parent=1 // loop_header
      %s20 = sphi 0, %s24
      %p21 = scmp.ge.s32.totalorder %s20, 6
      %s27 = sphi 0, %s39
      %s28 = sphi 0, %s35
      %s29 = sphi 0, %s27
      %s30 = sphi 0, %s28
      %s31 = sphi 0, %s29
      %s32 = sphi 0, %s30
      %s40 = sphi 0, %s40
      %s42 = sphi 0, %s40
      %s43 = sphi 0, %s42
      %s57 = sphi 0, %s43
      %s63 = sphi 0, %s65
      %s66 = sphi 0, %s63
      %s67 = sphi 0, %s66
      %s83 = sphi 0, %s67
      %s89 = sphi 0, %s91
      %s92 = sphi 0, %s89
      %s93 = sphi 0, %s92
      %s109 = sphi 0, %s93
      %s115 = sphi 0, %s117
      %s118 = sphi 0, %s115
      %s119 = sphi 0, %s118
      %s135 = sphi 0, %s119
      %s143 = sphi 0, %s145
      %s146 = sphi 0, %s143
      %s147 = sphi 0, %s146
      %s163 = sphi 0, %s147
    $region4: #{tpu_custom_call.1} parent=1 // loop_header_branch
      %23 = sbr.rel (%p21) target = $region8
    $region5: #{tpu_custom_call.1} parent=1 // loop_body
      %s25 = ssub.s32 %s20, 1
      %s26 = ssub.s32 %s20, 2
      %s33 = sadd.s32 1, %s28
      %p34 = scmp.ge.s32.totalorder %s33, 2
      %s35 = scalar_select %p34, 0, %s33
      %s36 = sadd.s32 1, %s27
      %s37 = scalar_select %p34, %s36, %s27
      %p38 = scmp.ge.s32.totalorder %s37, 2
      %s39 = scalar_select %p38, 0, %s37
      %s41 = sadd.s32 %s40, 1
      %p44 = scmp.eq.s32.totalorder %s20, 3
      %p45 = scmp.ne.s32.totalorder %s40, %s42
      %p46 = scmp.eq.s32.totalorder %s20, 0
      %p47 = por %p45, %p46
      %p48 = scmp.ne.s32.totalorder %s40, %s42
      %p49 = scmp.eq.s32.totalorder %s25, 3
      %p50 = por %p48, %p49
      %p51 = scmp.ne.s32.totalorder %s42, %s43
      %p52 = scmp.eq.s32.totalorder %s25, 0
      %p53 = por %p51, %p52
      %p54 = scmp.ne.s32.totalorder %s42, %s43
      %p55 = scmp.eq.s32.totalorder %s26, 3
      %p56 = por %p54, %p55
      %p58 = scmp.ne.s32.totalorder %s43, %s57
      %p59 = scmp.eq.s32.totalorder %s26, 0
      %p60 = por %p58, %p59
      %s61 = ssub.s32 %s28, %s35
      %p62 = scmp.eq.s32.totalorder %s61, 0
      %s64 = sadd.s32 %s63, 1
      %s65 = scalar_select %p62, %s63, %s64
      %p68 = pneg %p62
      %p69 = scmp.eq.s32.totalorder %s20, 3
      %p70 = por %p68, %p69
      %p71 = scmp.ne.s32.totalorder %s63, %s66
      %p72 = scmp.eq.s32.totalorder %s20, 0
      %p73 = por %p71, %p72
      %p74 = scmp.ne.s32.totalorder %s63, %s66
      %p75 = scmp.eq.s32.totalorder %s25, 3
      %p76 = por %p74, %p75
      %p77 = scmp.ne.s32.totalorder %s66, %s67
      %p78 = scmp.eq.s32.totalorder %s25, 0
      %p79 = por %p77, %p78
      %p80 = scmp.ne.s32.totalorder %s66, %s67
      %p81 = scmp.eq.s32.totalorder %s26, 3
      %p82 = por %p80, %p81
      %p84 = scmp.ne.s32.totalorder %s67, %s83
      %p85 = scmp.eq.s32.totalorder %s26, 0
      %p86 = por %p84, %p85
      %s87 = ssub.s32 %s27, %s39
      %p88 = scmp.eq.s32.totalorder %s87, 0
      %s90 = sadd.s32 %s89, 1
      %s91 = scalar_select %p88, %s89, %s90
      %p94 = pneg %p88
      %p95 = scmp.eq.s32.totalorder %s20, 3
      %p96 = por %p94, %p95
      %p97 = scmp.ne.s32.totalorder %s89, %s92
      %p98 = scmp.eq.s32.totalorder %s20, 0
      %p99 = por %p97, %p98
      %p100 = scmp.ne.s32.totalorder %s89, %s92
      %p101 = scmp.eq.s32.totalorder %s25, 3
      %p102 = por %p100, %p101
      %p103 = scmp.ne.s32.totalorder %s92, %s93
      %p104 = scmp.eq.s32.totalorder %s25, 0
      %p105 = por %p103, %p104
      %p106 = scmp.ne.s32.totalorder %s92, %s93
      %p107 = scmp.eq.s32.totalorder %s26, 3
      %p108 = por %p106, %p107
      %p110 = scmp.ne.s32.totalorder %s93, %s109
      %p111 = scmp.eq.s32.totalorder %s26, 0
      %p112 = por %p110, %p111
      %s113 = ssub.s32 %s27, %s39
      %p114 = scmp.eq.s32.totalorder %s113, 0
      %s116 = sadd.s32 %s115, 1
      %s117 = scalar_select %p114, %s115, %s116
      %p120 = pneg %p114
      %p121 = scmp.eq.s32.totalorder %s20, 3
      %p122 = por %p120, %p121
      %p123 = scmp.ne.s32.totalorder %s115, %s118
      %p124 = scmp.eq.s32.totalorder %s20, 0
      %p125 = por %p123, %p124
      %p126 = scmp.ne.s32.totalorder %s115, %s118
      %p127 = scmp.eq.s32.totalorder %s25, 3
      %p128 = por %p126, %p127
      %p129 = scmp.ne.s32.totalorder %s118, %s119
      %p130 = scmp.eq.s32.totalorder %s25, 0
      %p131 = por %p129, %p130
      %p132 = scmp.ne.s32.totalorder %s118, %s119
      %p133 = scmp.eq.s32.totalorder %s26, 3
      %p134 = por %p132, %p133
      %p136 = scmp.ne.s32.totalorder %s119, %s135
      %p137 = scmp.eq.s32.totalorder %s26, 0
      %p138 = por %p136, %p137
      %s139 = ssub.s32 %s28, %s35
      %s140 = ssub.s32 %s27, %s39
      %s141 = sor.u32 %s139, %s140
      %p142 = scmp.eq.s32.totalorder %s141, 0
      %s144 = sadd.s32 %s143, 1
      %s145 = scalar_select %p142, %s143, %s144
      %p148 = pneg %p142
      %p149 = scmp.eq.s32.totalorder %s20, 3
      %p150 = por %p148, %p149
      %p151 = scmp.ne.s32.totalorder %s143, %s146
      %p152 = scmp.eq.s32.totalorder %s20, 0
      %p153 = por %p151, %p152
      %p154 = scmp.ne.s32.totalorder %s143, %s146
      %p155 = scmp.eq.s32.totalorder %s25, 3
      %p156 = por %p154, %p155
      %p157 = scmp.ne.s32.totalorder %s146, %s147
      %p158 = scmp.eq.s32.totalorder %s25, 0
      %p159 = por %p157, %p158
      %p160 = scmp.ne.s32.totalorder %s146, %s147
      %p161 = scmp.eq.s32.totalorder %s26, 3
      %p162 = por %p160, %p161
      %p164 = scmp.ne.s32.totalorder %s147, %s163
      %p165 = scmp.eq.s32.totalorder %s26, 0
      %p166 = por %p164, %p165
      %p167 = scmp.le.s32.totalorder 1, %s20
      %p168 = scmp.lt.s32.totalorder %s20, 5
      %p169 = pnand %p167, %p168
      %p170 = pneg %p169
      // Predicated region
      $region9: #{tpu_custom_call.1} parent=5 // pred_check
        _
      $region10: #{tpu_custom_call.1} parent=5 // pred_check_branch
        %172 = sbr.rel (%p169) target = $region12
      $region11: #{tpu_custom_call.1} parent=5 // pred_region
        %s173 = ssub.s32 %s20, 1
        // Predicated region
        $region13: #{tpu_custom_call.1} parent=11 // pred_check
          %p174 = pneg %p53
        $region14: #{tpu_custom_call.1} parent=11 // pred_check_branch
          %176 = sbr.rel (%p174) target = $region16
        $region15: #{tpu_custom_call.1} parent=11 // pred_region
          _
        $region16: #{tpu_custom_call.1} parent=11 // pred_fallthru
          _
      $region12: #{tpu_custom_call.1} parent=5 // pred_fallthru
        _
      %p177 = scmp.lt.s32.totalorder %s20, 4
      // Predicated region
      $region17: #{tpu_custom_call.1} parent=5 // pred_check
        %p178 = pneg %p177
      $region18: #{tpu_custom_call.1} parent=5 // pred_check_branch
        %180 = sbr.rel (%p178) target = $region20
      $region19: #{tpu_custom_call.1} parent=5 // pred_region
        // Predicated region
        $region21: #{tpu_custom_call.1} parent=19 // pred_check
          %p181 = pneg %p73
        $region22: #{tpu_custom_call.1} parent=19 // pred_check_branch
          %183 = sbr.rel (%p181) target = $region24
        $region23: #{tpu_custom_call.1} parent=19 // pred_region
          %s184 = sand.u32 %s63, 1
          %s185 = scalar_lea.sflag [#allocation5], %s184
          %s186 = sand.u32 %s63, 1
          %s187 = smul.addr %s186, 4
          %s188 = scalar_lea.vmem [#allocation4], %s187
          %s190 = ssub.s32 64, 64
          %191 = vsyncadd %s185, %s190
          %s192 = smul.addr %s28, 64
          %s193 = scalar_lea.hbm %s1, %s192
          %s195 = sshll.u32 %s188, 4
          %s196 = int_to_ptr.vmem [resolvable:$true] %s195
          %198 = dma.hbm_to_vmem [thread:$0]  %s193, 64, %s196, %s185
        $region24: #{tpu_custom_call.1} parent=19 // pred_fallthru
          _
        // Predicated region
        $region25: #{tpu_custom_call.1} parent=19 // pred_check
          %p199 = pneg %p99
        $region26: #{tpu_custom_call.1} parent=19 // pred_check_branch
          %201 = sbr.rel (%p199) target = $region28
        $region27: #{tpu_custom_call.1} parent=19 // pred_region
          %s202 = sand.u32 %s20, 1
          %s203 = scalar_lea.sflag [#allocation8], %s202
          %s204 = sand.u32 %s89, 1
          %s205 = smul.addr %s204, 128
          %s206 = scalar_lea.vmem [#allocation7], %s205
          %s208 = ssub.s32 2048, 2048
          %209 = vsyncadd %s203, %s208
          %s210 = smul.addr %s27, 128
          %s211 = scalar_lea.hbm %s2, %s210
          %s212 = sshll.u32 %s206, 4
          %s213 = int_to_ptr.vmem [resolvable:$true] %s212
          %218 = dma.hbm_to_vmem [thread:$0]  %s211, 2048, %s213, %s203, 256, 128, 8
        $region28: #{tpu_custom_call.1} parent=19 // pred_fallthru
          _
        // Predicated region
        $region29: #{tpu_custom_call.1} parent=19 // pred_check
          %p219 = pneg %p125
        $region30: #{tpu_custom_call.1} parent=19 // pred_check_branch
          %221 = sbr.rel (%p219) target = $region32
        $region31: #{tpu_custom_call.1} parent=19 // pred_region
          %s222 = sand.u32 %s20, 1
          %s223 = scalar_lea.sflag [#allocation8], %s222
          %s224 = sand.u32 %s115, 1
          %s225 = smul.addr %s224, 128
          %s226 = scalar_lea.vmem [#allocation9], %s225
          %s228 = ssub.s32 2048, 2048
          %229 = vsyncadd %s223, %s228
          %s230 = smul.addr %s27, 128
          %s231 = scalar_lea.hbm %s3, %s230
          %s232 = sshll.u32 %s226, 4
          %s233 = int_to_ptr.vmem [resolvable:$true] %s232
          %238 = dma.hbm_to_vmem [thread:$0]  %s231, 2048, %s233, %s223, 256, 128, 8
        $region32: #{tpu_custom_call.1} parent=19 // pred_fallthru
          _
      $region20: #{tpu_custom_call.1} parent=5 // pred_fallthru
        _
      %p239 = scmp.le.s32.totalorder 1, %s20
      %p240 = scmp.lt.s32.totalorder %s20, 5
      %p241 = pnand %p239, %p240
      %p242 = pneg %p241
      // Predicated region
      $region33: #{tpu_custom_call.1} parent=5 // pred_check
        _
      $region34: #{tpu_custom_call.1} parent=5 // pred_check_branch
        %244 = sbr.rel (%p241) target = $region36
      $region35: #{tpu_custom_call.1} parent=5 // pred_region
        %s245 = ssub.s32 %s20, 1
        %s246 = sand.u32 %s66, 1
        %s247 = scalar_lea.sflag [#allocation5], %s246
        %s248 = sand.u32 %s66, 1
        %s249 = smul.addr %s248, 4
        %s250 = scalar_lea.vmem [#allocation4], %s249
        // Predicated region
        $region37: #{tpu_custom_call.1} parent=35 // pred_check
          %p251 = pneg %p79
        $region38: #{tpu_custom_call.1} parent=35 // pred_check_branch
          %253 = sbr.rel (%p251) target = $region40
        $region39: #{tpu_custom_call.1} parent=35 // pred_region
          %254 = dma.done %s247, 64
        $region40: #{tpu_custom_call.1} parent=35 // pred_fallthru
          _
        %s255 = sand.u32 %s25, 1
        %s256 = scalar_lea.sflag [#allocation8], %s255
        %s257 = sand.u32 %s92, 1
        %s258 = smul.addr %s257, 128
        %s259 = scalar_lea.vmem [#allocation7], %s258
        // Predicated region
        $region41: #{tpu_custom_call.1} parent=35 // pred_check
          %p260 = pneg %p105
        $region42: #{tpu_custom_call.1} parent=35 // pred_check_branch
          %262 = sbr.rel (%p260) target = $region44
        $region43: #{tpu_custom_call.1} parent=35 // pred_region
          %263 = dma.done %s256, 2048
        $region44: #{tpu_custom_call.1} parent=35 // pred_fallthru
          _
        %s264 = sand.u32 %s25, 1
        %s265 = scalar_lea.sflag [#allocation8], %s264
        %s266 = sand.u32 %s118, 1
        %s267 = smul.addr %s266, 128
        %s268 = scalar_lea.vmem [#allocation9], %s267
        // Predicated region
        $region45: #{tpu_custom_call.1} parent=35 // pred_check
          %p269 = pneg %p131
        $region46: #{tpu_custom_call.1} parent=35 // pred_check_branch
          %271 = sbr.rel (%p269) target = $region48
        $region47: #{tpu_custom_call.1} parent=35 // pred_region
          %272 = dma.done %s265, 2048
        $region48: #{tpu_custom_call.1} parent=35 // pred_fallthru
          _
        %p273 = pneg %p53
        %p274 = pneg %p50
        %s275 = sand.u32 %s66, 1
        %s276 = scalar_lea.sflag [#allocation5], %s275
        %s277 = sand.u32 %s66, 1
        %s278 = smul.addr %s277, 4
        %s279 = scalar_lea.vmem [#allocation4], %s278
        %p280 = pneg %p79
        %p281 = pneg %p76
        %s282 = sand.u32 %s25, 1
        %s283 = scalar_lea.sflag [#allocation8], %s282
        %s284 = sand.u32 %s92, 1
        %s285 = smul.addr %s284, 128
        %s286 = scalar_lea.vmem [#allocation7], %s285
        %p287 = pneg %p105
        %p288 = pneg %p102
        %s289 = sand.u32 %s25, 1
        %s290 = scalar_lea.sflag [#allocation8], %s289
        %s291 = sand.u32 %s118, 1
        %s292 = smul.addr %s291, 128
        %s293 = scalar_lea.vmem [#allocation9], %s292
        %p294 = pneg %p131
        %p295 = pneg %p128
        %p296 = pneg %p159
        %p297 = pneg %p156
        %s298 = sand.u32 %s146, 1
        %s299 = scalar_lea.sflag [#allocation6], %s298
        %s300 = sand.u32 %s146, 1
        %s301 = smul.addr %s300, 8
        %s302 = scalar_lea.vmem [#allocation10], %s301
        %p304 = scmp.eq.s32.totalorder %s30, 0
        // Predicated region
        $region49: #{tpu_custom_call.1} parent=35 // pred_check
          %p305 = pneg %p304
        $region50: #{tpu_custom_call.1} parent=35 // pred_check_branch
          %307 = sbr.rel (%p305) target = $region52
        $region51: #{tpu_custom_call.1} parent=35 // pred_region
          %v308 = vld [vmem:[%s268] sm:$0xff]
          %v309 = vld [vmem:[%s268 + $0x8] sm:$0xff]
          %v310 = vld [vmem:[%s268 + $0x10] sm:$0xff]
          %v311 = vld [vmem:[%s268 + $0x18] sm:$0xff]
          %v312 = vld [vmem:[%s268 + $0x20] sm:$0xff]
          %v313 = vld [vmem:[%s268 + $0x28] sm:$0xff]
          %v314 = vld [vmem:[%s268 + $0x30] sm:$0xff]
          %v315 = vld [vmem:[%s268 + $0x38] sm:$0xff]
          %v316 = vld [vmem:[%s268 + $0x40] sm:$0xff]
          %v317 = vld [vmem:[%s268 + $0x48] sm:$0xff]
          %v318 = vld [vmem:[%s268 + $0x50] sm:$0xff]
          %v319 = vld [vmem:[%s268 + $0x58] sm:$0xff]
          %v320 = vld [vmem:[%s268 + $0x60] sm:$0xff]
          %v321 = vld [vmem:[%s268 + $0x68] sm:$0xff]
          %v322 = vld [vmem:[%s268 + $0x70] sm:$0xff]
          %v323 = vld [vmem:[%s268 + $0x78] sm:$0xff]
          %v324 = vadd.f32 %v308, 1e-10
          %v325 = vadd.f32 %v309, 1e-10
          %v326 = vadd.f32 %v310, 1e-10
          %v327 = vadd.f32 %v311, 1e-10
          %v328 = vadd.f32 %v312, 1e-10
          %v329 = vadd.f32 %v313, 1e-10
          %v330 = vadd.f32 %v314, 1e-10
          %v331 = vadd.f32 %v315, 1e-10
          %v332 = vadd.f32 %v316, 1e-10
          %v333 = vadd.f32 %v317, 1e-10
          %v334 = vadd.f32 %v318, 1e-10
          %v335 = vadd.f32 %v319, 1e-10
          %v336 = vadd.f32 %v320, 1e-10
          %v337 = vadd.f32 %v321, 1e-10
          %v338 = vadd.f32 %v322, 1e-10
          %v339 = vadd.f32 %v323, 1e-10
          %v340 = vlog2.pop %v324
          %v341 = vmul.f32 %v340, 0.6931472
          %v342 = vlog2.pop %v325
          %v343 = vmul.f32 %v342, 0.6931472
          %v344 = vlog2.pop %v326
          %v345 = vmul.f32 %v344, 0.6931472
          %v346 = vlog2.pop %v327
          %v347 = vmul.f32 %v346, 0.6931472
          %v348 = vlog2.pop %v328
          %v349 = vmul.f32 %v348, 0.6931472
          %v350 = vlog2.pop %v329
          %v351 = vmul.f32 %v350, 0.6931472
          %v352 = vlog2.pop %v330
          %v353 = vmul.f32 %v352, 0.6931472
          %v354 = vlog2.pop %v331
          %v355 = vmul.f32 %v354, 0.6931472
          %v356 = vlog2.pop %v332
          %v357 = vmul.f32 %v356, 0.6931472
          %v358 = vlog2.pop %v333
          %v359 = vmul.f32 %v358, 0.6931472
          %v360 = vlog2.pop %v334
          %v361 = vmul.f32 %v360, 0.6931472
          %v362 = vlog2.pop %v335
          %v363 = vmul.f32 %v362, 0.6931472
          %v364 = vlog2.pop %v336
          %v365 = vmul.f32 %v364, 0.6931472
          %v366 = vlog2.pop %v337
          %v367 = vmul.f32 %v366, 0.6931472
          %v368 = vlog2.pop %v338
          %v369 = vmul.f32 %v368, 0.6931472
          %v370 = vlog2.pop %v339
          %v371 = vmul.f32 %v370, 0.6931472
          %v372 = vsub.f32 0.0, %v341
          %v373 = vsub.f32 0.0, %v343
          %v374 = vsub.f32 0.0, %v345
          %v375 = vsub.f32 0.0, %v347
          %v376 = vsub.f32 0.0, %v349
          %v377 = vsub.f32 0.0, %v351
          %v378 = vsub.f32 0.0, %v353
          %v379 = vsub.f32 0.0, %v355
          %v380 = vsub.f32 0.0, %v357
          %v381 = vsub.f32 0.0, %v359
          %v382 = vsub.f32 0.0, %v361
          %v383 = vsub.f32 0.0, %v363
          %v384 = vsub.f32 0.0, %v365
          %v385 = vsub.f32 0.0, %v367
          %v386 = vsub.f32 0.0, %v369
          %v387 = vsub.f32 0.0, %v371
          %v388 = vadd.f32 %v372, 1e-10
          %v389 = vadd.f32 %v373, 1e-10
          %v390 = vadd.f32 %v374, 1e-10
          %v391 = vadd.f32 %v375, 1e-10
          %v392 = vadd.f32 %v376, 1e-10
          %v393 = vadd.f32 %v377, 1e-10
          %v394 = vadd.f32 %v378, 1e-10
          %v395 = vadd.f32 %v379, 1e-10
          %v396 = vadd.f32 %v380, 1e-10
          %v397 = vadd.f32 %v381, 1e-10
          %v398 = vadd.f32 %v382, 1e-10
          %v399 = vadd.f32 %v383, 1e-10
          %v400 = vadd.f32 %v384, 1e-10
          %v401 = vadd.f32 %v385, 1e-10
          %v402 = vadd.f32 %v386, 1e-10
          %v403 = vadd.f32 %v387, 1e-10
          %v404 = vlog2.pop %v388
          %v405 = vmul.f32 %v404, 0.6931472
          %v406 = vlog2.pop %v389
          %v407 = vmul.f32 %v406, 0.6931472
          %v408 = vlog2.pop %v390
          %v409 = vmul.f32 %v408, 0.6931472
          %v410 = vlog2.pop %v391
          %v411 = vmul.f32 %v410, 0.6931472
          %v412 = vlog2.pop %v392
          %v413 = vmul.f32 %v412, 0.6931472
          %v414 = vlog2.pop %v393
          %v415 = vmul.f32 %v414, 0.6931472
          %v416 = vlog2.pop %v394
          %v417 = vmul.f32 %v416, 0.6931472
          %v418 = vlog2.pop %v395
          %v419 = vmul.f32 %v418, 0.6931472
          %v420 = vlog2.pop %v396
          %v421 = vmul.f32 %v420, 0.6931472
          %v422 = vlog2.pop %v397
          %v423 = vmul.f32 %v422, 0.6931472
          %v424 = vlog2.pop %v398
          %v425 = vmul.f32 %v424, 0.6931472
          %v426 = vlog2.pop %v399
          %v427 = vmul.f32 %v426, 0.6931472
          %v428 = vlog2.pop %v400
          %v429 = vmul.f32 %v428, 0.6931472
          %v430 = vlog2.pop %v401
          %v431 = vmul.f32 %v430, 0.6931472
          %v432 = vlog2.pop %v402
          %v433 = vmul.f32 %v432, 0.6931472
          %v434 = vlog2.pop %v403
          %v435 = vmul.f32 %v434, 0.6931472
          %v436 = vsub.f32 0.0, %v405
          %v437 = vsub.f32 0.0, %v407
          %v438 = vsub.f32 0.0, %v409
          %v439 = vsub.f32 0.0, %v411
          %v440 = vsub.f32 0.0, %v413
          %v441 = vsub.f32 0.0, %v415
          %v442 = vsub.f32 0.0, %v417
          %v443 = vsub.f32 0.0, %v419
          %v444 = vsub.f32 0.0, %v421
          %v445 = vsub.f32 0.0, %v423
          %v446 = vsub.f32 0.0, %v425
          %v447 = vsub.f32 0.0, %v427
          %v448 = vsub.f32 0.0, %v429
          %v449 = vsub.f32 0.0, %v431
          %v450 = vsub.f32 0.0, %v433
          %v451 = vsub.f32 0.0, %v435
          %v452 = vld [vmem:[%s259] sm:$0xff]
          %v453 = vld [vmem:[%s259 + $0x8] sm:$0xff]
          %v454 = vld [vmem:[%s259 + $0x10] sm:$0xff]
          %v455 = vld [vmem:[%s259 + $0x18] sm:$0xff]
          %v456 = vld [vmem:[%s259 + $0x20] sm:$0xff]
          %v457 = vld [vmem:[%s259 + $0x28] sm:$0xff]
          %v458 = vld [vmem:[%s259 + $0x30] sm:$0xff]
          %v459 = vld [vmem:[%s259 + $0x38] sm:$0xff]
          %v460 = vld [vmem:[%s259 + $0x40] sm:$0xff]
          %v461 = vld [vmem:[%s259 + $0x48] sm:$0xff]
          %v462 = vld [vmem:[%s259 + $0x50] sm:$0xff]
          %v463 = vld [vmem:[%s259 + $0x58] sm:$0xff]
          %v464 = vld [vmem:[%s259 + $0x60] sm:$0xff]
          %v465 = vld [vmem:[%s259 + $0x68] sm:$0xff]
          %v466 = vld [vmem:[%s259 + $0x70] sm:$0xff]
          %v467 = vld [vmem:[%s259 + $0x78] sm:$0xff]
          %v468 = vadd.f32 %v452, %v436
          %v469 = vadd.f32 %v453, %v437
          %v470 = vadd.f32 %v454, %v438
          %v471 = vadd.f32 %v455, %v439
          %v472 = vadd.f32 %v456, %v440
          %v473 = vadd.f32 %v457, %v441
          %v474 = vadd.f32 %v458, %v442
          %v475 = vadd.f32 %v459, %v443
          %v476 = vadd.f32 %v460, %v444
          %v477 = vadd.f32 %v461, %v445
          %v478 = vadd.f32 %v462, %v446
          %v479 = vadd.f32 %v463, %v447
          %v480 = vadd.f32 %v464, %v448
          %v481 = vadd.f32 %v465, %v449
          %v482 = vadd.f32 %v466, %v450
          %v483 = vadd.f32 %v467, %v451
          %s484 = sld [smem:[#allocation3]]
          %v485 = vstv %s484
          %v486 = vmul.f32 %v468, %v485
          %v487 = vmul.f32 %v469, %v485
          %v488 = vmul.f32 %v470, %v485
          %v489 = vmul.f32 %v471, %v485
          %v490 = vmul.f32 %v472, %v485
          %v491 = vmul.f32 %v473, %v485
          %v492 = vmul.f32 %v474, %v485
          %v493 = vmul.f32 %v475, %v485
          %v494 = vmul.f32 %v476, %v485
          %v495 = vmul.f32 %v477, %v485
          %v496 = vmul.f32 %v478, %v485
          %v497 = vmul.f32 %v479, %v485
          %v498 = vmul.f32 %v480, %v485
          %v499 = vmul.f32 %v481, %v485
          %v500 = vmul.f32 %v482, %v485
          %v501 = vmul.f32 %v483, %v485
          %v502 = vmax.f32 %v486, %v490
          %v503 = vmax.f32 %v487, %v491
          %v504 = vmax.f32 %v488, %v492
          %v505 = vmax.f32 %v489, %v493
          %v506 = vmax.f32 %v502, %v494
          %v507 = vmax.f32 %v503, %v495
          %v508 = vmax.f32 %v504, %v496
          %v509 = vmax.f32 %v505, %v497
          %v510 = vmax.f32 %v506, %v498
          %v511 = vmax.f32 %v507, %v499
          %v512 = vmax.f32 %v508, %v500
          %v513 = vmax.f32 %v509, %v501
          %v514 = vmax.f32 %v510, %v511
          %v515 = vmax.f32 %v512, %v513
          %v516 = vmax.f32 %v514, %v515
          %v517 = vrot.slane %v516, 4
          %v518 = vmax.f32 %v516, %v517
          %v519 = vrot.slane %v518, 2
          %v520 = vmax.f32 %v518, %v519
          %v521 = vrot.slane %v520, 1
          %v522 = vmax.f32 %v520, %v521
          %v523 = vsub.f32 %v486, %v522
          %v524 = vsub.f32 %v487, %v522
          %v525 = vsub.f32 %v488, %v522
          %v526 = vsub.f32 %v489, %v522
          %v527 = vsub.f32 %v490, %v522
          %v528 = vsub.f32 %v491, %v522
          %v529 = vsub.f32 %v492, %v522
          %v530 = vsub.f32 %v493, %v522
          %v531 = vsub.f32 %v494, %v522
          %v532 = vsub.f32 %v495, %v522
          %v533 = vsub.f32 %v496, %v522
          %v534 = vsub.f32 %v497, %v522
          %v535 = vsub.f32 %v498, %v522
          %v536 = vsub.f32 %v499, %v522
          %v537 = vsub.f32 %v500, %v522
          %v538 = vsub.f32 %v501, %v522
          %v539 = vmul.f32 %v523, 1.442695
          %v540 = vpow.pop %v539
          %v541 = vmul.f32 %v524, 1.442695
          %v542 = vpow.pop %v541
          %v543 = vmul.f32 %v525, 1.442695
          %v544 = vpow.pop %v543
          %v545 = vmul.f32 %v526, 1.442695
          %v546 = vpow.pop %v545
          %v547 = vmul.f32 %v527, 1.442695
          %v548 = vpow.pop %v547
          %v549 = vmul.f32 %v528, 1.442695
          %v550 = vpow.pop %v549
          %v551 = vmul.f32 %v529, 1.442695
          %v552 = vpow.pop %v551
          %v553 = vmul.f32 %v530, 1.442695
          %v554 = vpow.pop %v553
          %v555 = vmul.f32 %v531, 1.442695
          %v556 = vpow.pop %v555
          %v557 = vmul.f32 %v532, 1.442695
          %v558 = vpow.pop %v557
          %v559 = vmul.f32 %v533, 1.442695
          %v560 = vpow.pop %v559
          %v561 = vmul.f32 %v534, 1.442695
          %v562 = vpow.pop %v561
          %v563 = vmul.f32 %v535, 1.442695
          %v564 = vpow.pop %v563
          %v565 = vmul.f32 %v536, 1.442695
          %v566 = vpow.pop %v565
          %v567 = vmul.f32 %v537, 1.442695
          %v568 = vpow.pop %v567
          %v569 = vmul.f32 %v538, 1.442695
          %v570 = vpow.pop %v569
          %v571 = vadd.f32 %v540, %v542
          %v572 = vadd.f32 %v571, %v544
          %v573 = vadd.f32 %v572, %v546
          %v574 = vadd.f32 %v573, %v548
          %v575 = vadd.f32 %v574, %v550
          %v576 = vadd.f32 %v575, %v552
          %v577 = vadd.f32 %v576, %v554
          %v578 = vadd.f32 %v577, %v556
          %v579 = vadd.f32 %v578, %v558
          %v580 = vadd.f32 %v579, %v560
          %v581 = vadd.f32 %v580, %v562
          %v582 = vadd.f32 %v581, %v564
          %v583 = vadd.f32 %v582, %v566
          %v584 = vadd.f32 %v583, %v568
          %v585 = vadd.f32 %v584, %v570
          %v586 = vrot.slane %v585, 4
          %v587 = vadd.f32 %v585, %v586
          %v588 = vrot.slane %v587, 2
          %v589 = vadd.f32 %v587, %v588
          %v590 = vrot.slane %v589, 1
          %v591 = vadd.f32 %v589, %v590
          %v592 = vrcp.pop %v591
          %v593 = vmul.f32 %v540, %v592
          %v594 = vmul.f32 %v542, %v592
          %v595 = vmul.f32 %v544, %v592
          %v596 = vmul.f32 %v546, %v592
          %v597 = vmul.f32 %v548, %v592
          %v598 = vmul.f32 %v550, %v592
          %v599 = vmul.f32 %v552, %v592
          %v600 = vmul.f32 %v554, %v592
          %v601 = vmul.f32 %v556, %v592
          %v602 = vmul.f32 %v558, %v592
          %v603 = vmul.f32 %v560, %v592
          %v604 = vmul.f32 %v562, %v592
          %v605 = vmul.f32 %v564, %v592
          %v606 = vmul.f32 %v566, %v592
          %v607 = vmul.f32 %v568, %v592
          %v608 = vmul.f32 %v570, %v592
          %v609 = vpack.c.bf16 %v594, %v593
          %v610 = vpack.c.bf16 %v596, %v595
          %v611 = vpack.c.bf16 %v598, %v597
          %v612 = vpack.c.bf16 %v600, %v599
          %v613 = vpack.c.bf16 %v602, %v601
          %v614 = vpack.c.bf16 %v604, %v603
          %v615 = vpack.c.bf16 %v606, %v605
          %v616 = vpack.c.bf16 %v608, %v607
          %v625 = vunpack.c.l.b16 %v609
          %v626 = vunpack.c.h.b16 %v609
          %v627 = vunpack.c.l.b16 %v610
          %v628 = vunpack.c.h.b16 %v610
          %v629 = vunpack.c.l.b16 %v611
          %v630 = vunpack.c.h.b16 %v611
          %v631 = vunpack.c.l.b16 %v612
          %v632 = vunpack.c.h.b16 %v612
          %v633 = vunpack.c.l.b16 %v613
          %v634 = vunpack.c.h.b16 %v613
          %v635 = vunpack.c.l.b16 %v614
          %v636 = vunpack.c.h.b16 %v614
          %v637 = vunpack.c.l.b16 %v615
          %v638 = vunpack.c.h.b16 %v615
          %v639 = vunpack.c.l.b16 %v616
          %v640 = vunpack.c.h.b16 %v616
          %v641 = vpack.c.b16 %v625, %v625
          %v642 = vpack.c.b16 %v626, %v626
          %v643 = vpack.c.b16 %v627, %v627
          %v644 = vpack.c.b16 %v628, %v628
          %v645 = vpack.c.b16 %v629, %v629
          %v646 = vpack.c.b16 %v630, %v630
          %v647 = vpack.c.b16 %v631, %v631
          %v648 = vpack.c.b16 %v632, %v632
          %v649 = vpack.c.b16 %v633, %v633
          %v650 = vpack.c.b16 %v634, %v634
          %v651 = vpack.c.b16 %v635, %v635
          %v652 = vpack.c.b16 %v636, %v636
          %v653 = vpack.c.b16 %v637, %v637
          %v654 = vpack.c.b16 %v638, %v638
          %v655 = vpack.c.b16 %v639, %v639
          %v656 = vpack.c.b16 %v640, %v640
          %673 = vst [vmem:[#allocation2] sm:$0xf] %v641
          %674 = vst [vmem:[#allocation2 + $0x4] sm:$0xf] %v642
          %675 = vst [vmem:[#allocation2 + $0x8] sm:$0xf] %v643
          %676 = vst [vmem:[#allocation2 + $0xc] sm:$0xf] %v644
          %677 = vst [vmem:[#allocation2 + $0x10] sm:$0xf] %v645
          %678 = vst [vmem:[#allocation2 + $0x14] sm:$0xf] %v646
          %679 = vst [vmem:[#allocation2 + $0x18] sm:$0xf] %v647
          %680 = vst [vmem:[#allocation2 + $0x1c] sm:$0xf] %v648
          %681 = vst [vmem:[#allocation2 + $0x20] sm:$0xf] %v649
          %682 = vst [vmem:[#allocation2 + $0x24] sm:$0xf] %v650
          %683 = vst [vmem:[#allocation2 + $0x28] sm:$0xf] %v651
          %684 = vst [vmem:[#allocation2 + $0x2c] sm:$0xf] %v652
          %685 = vst [vmem:[#allocation2 + $0x30] sm:$0xf] %v653
          %686 = vst [vmem:[#allocation2 + $0x34] sm:$0xf] %v654
          %687 = vst [vmem:[#allocation2 + $0x38] sm:$0xf] %v655
          %688 = vst [vmem:[#allocation2 + $0x3c] sm:$0xf] %v656
        $region52: #{tpu_custom_call.1} parent=35 // pred_fallthru
          _
        %v689 = vld [vmem:[%s250] sm:$0xf]
        %v690 = vld [vmem:[#allocation2] sm:$0xf]
        %v691 = vld [vmem:[#allocation2 + $0x4] sm:$0xf]
        %v692 = vld [vmem:[#allocation2 + $0x8] sm:$0xf]
        %v693 = vld [vmem:[#allocation2 + $0xc] sm:$0xf]
        %v694 = vld [vmem:[#allocation2 + $0x10] sm:$0xf]
        %v695 = vld [vmem:[#allocation2 + $0x14] sm:$0xf]
        %v696 = vld [vmem:[#allocation2 + $0x18] sm:$0xf]
        %v697 = vld [vmem:[#allocation2 + $0x1c] sm:$0xf]
        %v698 = vld [vmem:[#allocation2 + $0x20] sm:$0xf]
        %v699 = vld [vmem:[#allocation2 + $0x24] sm:$0xf]
        %v700 = vld [vmem:[#allocation2 + $0x28] sm:$0xf]
        %v701 = vld [vmem:[#allocation2 + $0x2c] sm:$0xf]
        %v702 = vld [vmem:[#allocation2 + $0x30] sm:$0xf]
        %v703 = vld [vmem:[#allocation2 + $0x34] sm:$0xf]
        %v704 = vld [vmem:[#allocation2 + $0x38] sm:$0xf]
        %v705 = vld [vmem:[#allocation2 + $0x3c] sm:$0xf]
        %v722 = vunpack.c.l.b16 %v690
        %v723 = vunpack.c.l.b16 %v691
        %v724 = vunpack.c.l.b16 %v692
        %v725 = vunpack.c.l.b16 %v693
        %v726 = vunpack.c.l.b16 %v694
        %v727 = vunpack.c.l.b16 %v695
        %v728 = vunpack.c.l.b16 %v696
        %v729 = vunpack.c.l.b16 %v697
        %v730 = vunpack.c.l.b16 %v698
        %v731 = vunpack.c.l.b16 %v699
        %v732 = vunpack.c.l.b16 %v700
        %v733 = vunpack.c.l.b16 %v701
        %v734 = vunpack.c.l.b16 %v702
        %v735 = vunpack.c.l.b16 %v703
        %v736 = vunpack.c.l.b16 %v704
        %v737 = vunpack.c.l.b16 %v705
        %v738 = vpack.c.b16 %v723, %v722
        %v739 = vpack.c.b16 %v725, %v724
        %v740 = vpack.c.b16 %v727, %v726
        %v741 = vpack.c.b16 %v729, %v728
        %v742 = vpack.c.b16 %v731, %v730
        %v743 = vpack.c.b16 %v733, %v732
        %v744 = vpack.c.b16 %v735, %v734
        %v745 = vpack.c.b16 %v737, %v736
        %754 = vmatprep.subr.bf16.mxu0 0
        %755 = vmatpush1.bf16.msra.mxu0 %v745
        %756 = vmatprep.subr.bf16.mxu0 0
        %757 = vmatpush1.bf16.msra.mxu0 %v744
        %758 = vmatprep.subr.bf16.mxu0 0
        %759 = vmatpush1.bf16.msra.mxu0 %v743
        %760 = vmatprep.subr.bf16.mxu0 0
        %761 = vmatpush1.bf16.msra.mxu0 %v742
        %762 = vmatprep.subr.bf16.mxu0 0
        %763 = vmatpush1.bf16.msra.mxu0 %v741
        %764 = vmatprep.subr.bf16.mxu0 0
        %765 = vmatpush1.bf16.msra.mxu0 %v740
        %766 = vmatprep.subr.bf16.mxu0 0
        %767 = vmatpush1.bf16.msra.mxu0 %v739
        %768 = vmatprep.subr.bf16.mxu0 0
        %769 = vmatpush1.bf16.msra.mxu0 %v738
        %770 = vmatprep.subr.bf16.mxu0 0
        %771 = vmatpush2.bf16.msra.mxu0 0
        %772 = vmatprep.subr.bf16.mxu0 0
        %773 = vmatpush2.bf16.msra.mxu0 0
        %774 = vmatprep.subr.bf16.mxu0 0
        %775 = vmatpush2.bf16.msra.mxu0 0
        %776 = vmatprep.subr.bf16.mxu0 0
        %777 = vmatpush2.bf16.msra.mxu0 0
        %778 = vmatprep.subr.bf16.mxu0 0
        %779 = vmatpush2.bf16.msra.mxu0 0
        %780 = vmatprep.subr.bf16.mxu0 0
        %781 = vmatpush2.bf16.msra.mxu0 0
        %782 = vmatprep.subr.bf16.mxu0 0
        %783 = vmatpush2.bf16.msra.mxu0 0
        %784 = vmatprep.subr.bf16.mxu0 0
        %785 = vmatpush2.bf16.msra.mxu0 0
        %786 = vmatprep.mubr.bf16.mxu0 0
        %787 = vmatmul.mubr.bf16.gmra.mxu0 %v689
        %v788 = vpop.f32.mrf.mxu0
        %v789 = vadd.f32 0.0, %v788
        %v790 = vpop.f32.mrf.mxu0
        %v791 = vpop.f32.mrf.mxu0
        %v792 = vpop.f32.mrf.mxu0
        %793 = vdwg.mxu0
        %794 = vst [vmem:[%s302] sm:$0xff] %v789
        %s795 = sand.u32 %s146, 1
        %s796 = scalar_lea.sflag [#allocation6], %s795
        %s797 = sand.u32 %s146, 1
        %s798 = smul.addr %s797, 8
        %s799 = scalar_lea.vmem [#allocation10], %s798
        // Predicated region
        $region53: #{tpu_custom_call.1} parent=35 // pred_check
          %p800 = pneg %p156
        $region54: #{tpu_custom_call.1} parent=35 // pred_check_branch
          %802 = sbr.rel (%p800) target = $region56
        $region55: #{tpu_custom_call.1} parent=35 // pred_region
          %s804 = ssub.s32 128, 128
          %805 = vsyncadd %s796, %s804
          %s806 = smul.addr %s30, 2
          %s807 = sadd.s32 %s29, %s806
          %s808 = smul.addr %s807, 128
          %s809 = scalar_lea.hbm %s4, %s808
          %s811 = sshll.u32 %s799, 4
          %s812 = int_to_ptr.vmem [resolvable:$true] %s811
          %814 = dma.vmem_to_hbm [thread:$0]  %s812, 128, %s809, %s796
        $region56: #{tpu_custom_call.1} parent=35 // pred_fallthru
          _
      $region36: #{tpu_custom_call.1} parent=5 // pred_fallthru
        _
      %p815 = scmp.le.s32.totalorder 2, %s20
      // Predicated region
      $region57: #{tpu_custom_call.1} parent=5 // pred_check
        %p816 = pneg %p815
      $region58: #{tpu_custom_call.1} parent=5 // pred_check_branch
        %818 = sbr.rel (%p816) target = $region60
      $region59: #{tpu_custom_call.1} parent=5 // pred_region
        %s819 = ssub.s32 %s20, 2
        // Predicated region
        $region61: #{tpu_custom_call.1} parent=59 // pred_check
          %p820 = pneg %p162
        $region62: #{tpu_custom_call.1} parent=59 // pred_check_branch
          %822 = sbr.rel (%p820) target = $region64
        $region63: #{tpu_custom_call.1} parent=59 // pred_region
          %s823 = sand.u32 %s147, 1
          %s824 = scalar_lea.sflag [#allocation6], %s823
          %s825 = sand.u32 %s147, 1
          %s826 = smul.addr %s825, 8
          %s827 = scalar_lea.vmem [#allocation10], %s826
          %828 = dma.done %s824, 128
        $region64: #{tpu_custom_call.1} parent=59 // pred_fallthru
          _
      $region60: #{tpu_custom_call.1} parent=5 // pred_fallthru
        _
    $region6: #{tpu_custom_call.1} parent=1 // loop_footer
      %s24 = sadd.s32 1, %s20
    $region7: #{tpu_custom_call.1} parent=1 // loop_footer_branch
      %19 = sbr.rel target = $region3
    $region8: #{tpu_custom_call.1} parent=1 // loop_exit
      _
    %829 = vsyncpa [#allocation5], 1
    %s830 = scalar_lea.sflag [#allocation5], 1
    %831 = vsyncpa %s830, 1
    %832 = vsyncpa [#allocation8], 1
    %s833 = scalar_lea.sflag [#allocation8], 1
    %834 = vsyncpa %s833, 1
    %835 = vsyncpa [#allocation6], 1
    %s836 = scalar_lea.sflag [#allocation6], 1
    %837 = vsyncpa %s836, 1

</llo_original>
